<compile_context>
chip_gen: v6e
topology: v6e:2x2x1
jax: 0.10.0
libtpu: 0.0.40
codegen_flags: <defaults>
</compile_context>

<pallas_src>
import jax
import jax.numpy as jnp
from jax import lax
from jax.experimental import pallas as pl
from jax.experimental.pallas import tpu as pltpu

INPUT_SIZE = 88
HIDDEN_SIZE = 64
OUTPUT_SIZE = 64   # third Linear in the reference takes `output_size` (=64) inputs
F_PAD = 128        # 88 features zero-padded to one full lane group
LANE = 128


def _round_up(n: int, m: int) -> int:
    return ((n + m - 1) // m) * m


def mlp_kernel(x_ref, w1_ref, b1_ref, w2_ref, b2_ref, w3_ref, b3_ref, o_ref):
    # x_ref: (TILE_B, 128) bf16   w1: (128, 64) bf16   w2: (64, 64) bf16
    # b1/b2: (1, 64) f32          w3: (1, 64) f32      b3: (1, 1) f32
    # o_ref: (1, TILE_B) f32  (lane-dense output row for this tile)
    x = x_ref[...]
    h1 = jnp.dot(x, w1_ref[...], preferred_element_type=jnp.float32)   # (TILE_B, 64)
    h1 = jnp.maximum(h1 + b1_ref[...], 0.0)                            # ReLU (f32)
    h2 = jnp.dot(h1.astype(jnp.bfloat16), w2_ref[...],
                 preferred_element_type=jnp.float32)                   # (TILE_B, 64)
    h2 = jnp.maximum(h2 + b2_ref[...], 0.0)                            # ReLU (f32)
    # Layer 3: contract w3 (1,64) with h2 (TILE_B,64) over the 64-dim, which
    # yields a lane-dense (1, TILE_B) row directly (no (TILE_B,1) masked store).
    out = lax.dot_general(
        w3_ref[...], h2,
        dimension_numbers=(((1,), (1,)), ((), ())),
        preferred_element_type=jnp.float32,
    )                                                                  # (1, TILE_B)
    o_ref[...] = (out + b3_ref[...]).astype(o_ref.dtype)


def two_hidden_layers(x, w1, b1, w2, b2, w3, b3, *, tile_b=1024):
    """x: (B, 88) f32; weights stored (in, out); returns (B, 1) f32."""
    B = x.shape[0]
    assert x.shape[1] == INPUT_SIZE

    tile_b = min(tile_b, _round_up(max(B, 1), LANE))
    b_pad = _round_up(B, tile_b)
    num_tiles = b_pad // tile_b

    # Pad features 88->128 and batch B->b_pad; stream big operands as bf16.
    xp = jnp.zeros((b_pad, F_PAD), jnp.bfloat16)
    xp = xp.at[:B, :INPUT_SIZE].set(x.astype(jnp.bfloat16))
    w1p = jnp.zeros((F_PAD, HIDDEN_SIZE), jnp.bfloat16)
    w1p = w1p.at[:INPUT_SIZE, :].set(w1.astype(jnp.bfloat16))
    w2b = w2.astype(jnp.bfloat16)
    b1r = jnp.reshape(b1, (1, HIDDEN_SIZE)).astype(jnp.float32)
    b2r = jnp.reshape(b2, (1, HIDDEN_SIZE)).astype(jnp.float32)
    w3r = jnp.reshape(w3, (1, OUTPUT_SIZE)).astype(jnp.float32)
    b3r = jnp.reshape(b3, (1, 1)).astype(jnp.float32)

    out_row = pl.pallas_call(
        mlp_kernel,
        out_shape=jax.ShapeDtypeStruct((1, b_pad), jnp.float32),
        grid=(num_tiles,),
        in_specs=[
            pl.BlockSpec((tile_b, F_PAD), lambda i: (i, 0)),             # x tile
            pl.BlockSpec((F_PAD, HIDDEN_SIZE), lambda i: (0, 0)),        # w1 (resident)
            pl.BlockSpec((1, HIDDEN_SIZE), lambda i: (0, 0)),            # b1 (resident)
            pl.BlockSpec((HIDDEN_SIZE, HIDDEN_SIZE), lambda i: (0, 0)),  # w2 (resident)
            pl.BlockSpec((1, HIDDEN_SIZE), lambda i: (0, 0)),            # b2 (resident)
            pl.BlockSpec((1, HIDDEN_SIZE), lambda i: (0, 0)),            # w3 (resident)
            pl.BlockSpec((1, 1), lambda i: (0, 0)),                      # b3 (resident)
        ],
        out_specs=pl.BlockSpec((1, tile_b), lambda i: (0, i)),           # lane-dense
        compiler_params=pltpu.CompilerParams(
            dimension_semantics=("parallel",),
        ),
    )(xp, w1p, b1r, w2b, b2r, w3r, b3r)

    return out_row[0, :B].reshape(B, 1)


def init_params(key):
    """Deterministic synthetic parameters matching the PyTorch module's shapes."""
    ks = jax.random.split(key, 6)
    w1 = jax.random.normal(ks[0], (INPUT_SIZE, HIDDEN_SIZE), jnp.float32) * 0.05
    b1 = jax.random.normal(ks[1], (1, HIDDEN_SIZE), jnp.float32) * 0.05
    w2 = jax.random.normal(ks[2], (HIDDEN_SIZE, HIDDEN_SIZE), jnp.float32) * 0.05
    b2 = jax.random.normal(ks[3], (1, HIDDEN_SIZE), jnp.float32) * 0.05
    w3 = jax.random.normal(ks[4], (OUTPUT_SIZE, 1), jnp.float32) * 0.05
    b3 = jax.random.normal(ks[5], (1, 1), jnp.float32) * 0.05
    return w1, b1, w2, b2, w3, b3


def reference_forward(x, w1, b1, w2, b2, w3, b3):
    h1 = jnp.maximum(x @ w1 + b1, 0.0)
    h2 = jnp.maximum(h1 @ w2 + b2, 0.0)
    return h2 @ w3 + b3


if __name__ == "__main__":
    key = jax.random.PRNGKey(0)
    k_x, k_p = jax.random.split(key)

    B = 8
    x = jax.random.normal(k_x, (B, INPUT_SIZE), jnp.float32)
    params = init_params(k_p)

    out = two_hidden_layers(x, *params)
    out = jax.block_until_ready(out)

    ref = reference_forward(x, *params)
    assert out.shape == (B, 1)
    # bf16 streaming of x/w1/w2 (with f32 accumulation) => relaxed tolerance.
    assert jnp.allclose(out, ref, atol=2e-2, rtol=2e-2), float(jnp.max(jnp.abs(out - ref)))

    print("KERNEL_OK")
</pallas_src>

<mosaic_0001>
module attributes {stable_mosaic.version = 11 : i64} {
  func.func @mlp_kernel(%arg0: i32, %arg1: memref<128x128xbf16, #tpu.memory_space<vmem>>, %arg2: memref<128x64xbf16, #tpu.memory_space<vmem>>, %arg3: memref<1x64xf32, #tpu.memory_space<vmem>>, %arg4: memref<64x64xbf16, #tpu.memory_space<vmem>>, %arg5: memref<1x64xf32, #tpu.memory_space<vmem>>, %arg6: memref<1x64xf32, #tpu.memory_space<vmem>>, %arg7: memref<1x1xf32, #tpu.memory_space<vmem>>, %arg8: memref<1x128xf32, #tpu.memory_space<vmem>>) attributes {dimension_semantics = [#tpu.dimension_semantics<parallel>], iteration_bounds = array<i64: 1>, scalar_prefetch = 0 : i64, scratch_operands = 0 : i64, tpu.core_type = #tpu.core_type<tc>, window_params = [{transform_indices = @transform_0, window_bounds = array<i64: 128, 128>}, {pipeline_mode = #tpu.pipeline_mode<synchronous>, transform_indices = @transform_1, window_bounds = array<i64: 128, 64>}, {pipeline_mode = #tpu.pipeline_mode<synchronous>, transform_indices = @transform_2, window_bounds = array<i64: 1, 64>}, {pipeline_mode = #tpu.pipeline_mode<synchronous>, transform_indices = @transform_3, window_bounds = array<i64: 64, 64>}, {pipeline_mode = #tpu.pipeline_mode<synchronous>, transform_indices = @transform_4, window_bounds = array<i64: 1, 64>}, {pipeline_mode = #tpu.pipeline_mode<synchronous>, transform_indices = @transform_5, window_bounds = array<i64: 1, 64>}, {pipeline_mode = #tpu.pipeline_mode<synchronous>, transform_indices = @transform_6, window_bounds = array<i64: 1, 1>}, {transform_indices = @transform_7, window_bounds = array<i64: 1, 128>}]} {
    %c0 = arith.constant 0 : index
    %c0_0 = arith.constant 0 : index
    %0 = vector.load %arg1[%c0, %c0_0] : memref<128x128xbf16, #tpu.memory_space<vmem>>, vector<128x128xbf16>
    %c0_1 = arith.constant 0 : index
    %c0_2 = arith.constant 0 : index
    %1 = vector.load %arg2[%c0_1, %c0_2] : memref<128x64xbf16, #tpu.memory_space<vmem>>, vector<128x64xbf16>
    %cst = arith.constant dense<0.000000e+00> : vector<128x64xf32>
    %2 = tpu.matmul %0, %1, %cst {dimension_numbers = #tpu.dot_dimension_numbers<[1], [0], [0], [1], [0, 0, 1, 1], [], []>} : vector<128x128xbf16>, vector<128x64xbf16>, vector<128x64xf32> -> vector<128x64xf32>
    %c0_3 = arith.constant 0 : index
    %c0_4 = arith.constant 0 : index
    %3 = vector.load %arg3[%c0_3, %c0_4] : memref<1x64xf32, #tpu.memory_space<vmem>>, vector<1x64xf32>
    %4 = vector.broadcast %3 : vector<1x64xf32> to vector<128x64xf32>
    %5 = arith.addf %2, %4 : vector<128x64xf32>
    %cst_5 = arith.constant 0.000000e+00 : f32
    %6 = vector.broadcast %cst_5 : f32 to vector<128x64xf32>
    %7 = arith.maximumf %5, %6 : vector<128x64xf32>
    %8 = arith.truncf %7 : vector<128x64xf32> to vector<128x64xbf16>
    %c0_6 = arith.constant 0 : index
    %c0_7 = arith.constant 0 : index
    %9 = vector.load %arg4[%c0_6, %c0_7] : memref<64x64xbf16, #tpu.memory_space<vmem>>, vector<64x64xbf16>
    %cst_8 = arith.constant dense<0.000000e+00> : vector<128x64xf32>
    %10 = tpu.matmul %8, %9, %cst_8 {dimension_numbers = #tpu.dot_dimension_numbers<[1], [0], [0], [1], [0, 0, 1, 1], [], []>} : vector<128x64xbf16>, vector<64x64xbf16>, vector<128x64xf32> -> vector<128x64xf32>
    %c0_9 = arith.constant 0 : index
    %c0_10 = arith.constant 0 : index
    %11 = vector.load %arg5[%c0_9, %c0_10] : memref<1x64xf32, #tpu.memory_space<vmem>>, vector<1x64xf32>
    %12 = vector.broadcast %11 : vector<1x64xf32> to vector<128x64xf32>
    %13 = arith.addf %10, %12 : vector<128x64xf32>
    %cst_11 = arith.constant 0.000000e+00 : f32
    %14 = vector.broadcast %cst_11 : f32 to vector<128x64xf32>
    %15 = arith.maximumf %13, %14 : vector<128x64xf32>
    %c0_12 = arith.constant 0 : index
    %c0_13 = arith.constant 0 : index
    %16 = vector.load %arg6[%c0_12, %c0_13] : memref<1x64xf32, #tpu.memory_space<vmem>>, vector<1x64xf32>
    %cst_14 = arith.constant dense<0.000000e+00> : vector<1x128xf32>
    %17 = tpu.matmul %16, %15, %cst_14 {dimension_numbers = #tpu.dot_dimension_numbers<[1], [1], [0], [0], [0, 0, 1, 0], [], []>} : vector<1x64xf32>, vector<128x64xf32>, vector<1x128xf32> -> vector<1x128xf32>
    %c0_15 = arith.constant 0 : index
    %c0_16 = arith.constant 0 : index
    %18 = vector.load %arg7[%c0_15, %c0_16] : memref<1x1xf32, #tpu.memory_space<vmem>>, vector<1x1xf32>
    %19 = vector.broadcast %18 : vector<1x1xf32> to vector<1x128xf32>
    %20 = arith.addf %17, %19 : vector<1x128xf32>
    %c0_17 = arith.constant 0 : index
    %c0_18 = arith.constant 0 : index
    %21 = vector.load %arg8[%c0_17, %c0_18] : memref<1x128xf32, #tpu.memory_space<vmem>>, vector<1x128xf32>
    tpu.vector_store %arg8[%c0_17, %c0_18], %20 {strides = array<i32>} : memref<1x128xf32, #tpu.memory_space<vmem>>, vector<1x128xf32>,
    return
  }
  func.func @transform_0(%arg0: i32) -> (i32, i32) {
    %c0_i32 = arith.constant 0 : i32
    %c0_i32_0 = arith.constant 0 : i32
    return %arg0, %c0_i32 : i32, i32
  }
  func.func @transform_1(%arg0: i32) -> (i32, i32) {
    %c0_i32 = arith.constant 0 : i32
    %c0_i32_0 = arith.constant 0 : i32
    %c0_i32_1 = arith.constant 0 : i32
    return %c0_i32, %c0_i32_0 : i32, i32
  }
  func.func @transform_2(%arg0: i32) -> (i32, i32) {
    %c0_i32 = arith.constant 0 : i32
    %c0_i32_0 = arith.constant 0 : i32
    %c0_i32_1 = arith.constant 0 : i32
    return %c0_i32, %c0_i32_0 : i32, i32
  }
  func.func @transform_3(%arg0: i32) -> (i32, i32) {
    %c0_i32 = arith.constant 0 : i32
    %c0_i32_0 = arith.constant 0 : i32
    %c0_i32_1 = arith.constant 0 : i32
    return %c0_i32, %c0_i32_0 : i32, i32
  }
  func.func @transform_4(%arg0: i32) -> (i32, i32) {
    %c0_i32 = arith.constant 0 : i32
    %c0_i32_0 = arith.constant 0 : i32
    %c0_i32_1 = arith.constant 0 : i32
    return %c0_i32, %c0_i32_0 : i32, i32
  }
  func.func @transform_5(%arg0: i32) -> (i32, i32) {
    %c0_i32 = arith.constant 0 : i32
    %c0_i32_0 = arith.constant 0 : i32
    %c0_i32_1 = arith.constant 0 : i32
    return %c0_i32, %c0_i32_0 : i32, i32
  }
  func.func @transform_6(%arg0: i32) -> (i32, i32) {
    %c0_i32 = arith.constant 0 : i32
    %c0_i32_0 = arith.constant 0 : i32
    %c0_i32_1 = arith.constant 0 : i32
    return %c0_i32, %c0_i32_0 : i32, i32
  }
  func.func @transform_7(%arg0: i32) -> (i32, i32) {
    %c0_i32 = arith.constant 0 : i32
    %c0_i32_0 = arith.constant 0 : i32
    return %c0_i32, %arg0 : i32, i32
  }
}

</mosaic_0001>

<llo_original>
// kernel: tpu_custom_call.1
$region0: #{tpu_custom_call.1}
  #allocation0 [shape = 'u32[]', space=smem, size = 0x4, offset = 0x4, fixed_abs, tag = 'smem constant byte address 0x4 - core index']
  #allocation1 [shape = 'u32[144,128]{1,0:T(1,128)}', space=vmem, size = 0x12000, scoped, tag = 'internal scratch']
  #allocation2 [shape = 'f32[1,1]{1,0:T(1,128)S(1)}', space=vmem, size = 0x200, scoped, tag = 'scoped memory for tpu_custom_call.1']
  %s0 = inlined_call_operand.vmem [shape: bf16[128,128], index: 0, kind: input, shape index: {}]
  %s1 = inlined_call_operand.vmem [shape: bf16[128,64], index: 1, kind: input, shape index: {}]
  %s2 = inlined_call_operand.vmem [shape: f32[1,64], index: 2, kind: input, shape index: {}]
  %s3 = inlined_call_operand.vmem [shape: bf16[64,64], index: 3, kind: input, shape index: {}]
  %s4 = inlined_call_operand.vmem [shape: f32[1,64], index: 4, kind: input, shape index: {}]
  %s5 = inlined_call_operand.vmem [shape: f32[1,64], index: 5, kind: input, shape index: {}]
  %s6 = inlined_call_operand.<no memory space> [shape: f32[1,1], index: 6, kind: input, shape index: {}]
  %s7 = inlined_call_operand.hbm [shape: f32[1,128], index: 7, kind: output, shape index: {}]
  %s8 = sld [smem:[#allocation0]]
  $region38: #{tpu_custom_call.1} parent=0
    _
  %s10 = ssub.s32 1, %s8
  %s11 = scalar_select 0, %s10, %s8
  %v12 = vstv %s6
  %13 = vst [vmem:[#allocation2] sm:$0x1] %v12
  $region1: #{tpu_custom_call.1} parent=0
    #allocation3 [shape = 'u8[512]{0}', space=vmem, size = 0x400, scoped, tag = 'output window, operand 0, single buffered']
    #allocation4 [shape = 's32[1]{0}', space=sflag, size = 0x4, scoped, tag = 'scoped memory for tpu_custom_call.1']
    %14 = vsyncpa [#allocation4], 0
    // Predicated region
    $region2: #{tpu_custom_call.1} parent=1 // pred_check
      _
    $region3: #{tpu_custom_call.1} parent=1 // pred_check_branch
      %16 = sbr.rel (0) target = $region5
    $region4: #{tpu_custom_call.1} parent=1 // pred_region
      _
    $region5: #{tpu_custom_call.1} parent=1 // pred_fallthru
      _
    // Predicated region
    $region6: #{tpu_custom_call.1} parent=1 // pred_check
      _
    $region7: #{tpu_custom_call.1} parent=1 // pred_check_branch
      %18 = sbr.rel (0) target = $region9
    $region8: #{tpu_custom_call.1} parent=1 // pred_region
      _
    $region9: #{tpu_custom_call.1} parent=1 // pred_fallthru
      _
    // Predicated region
    $region10: #{tpu_custom_call.1} parent=1 // pred_check
      _
    $region11: #{tpu_custom_call.1} parent=1 // pred_check_branch
      %20 = sbr.rel (0) target = $region13
    $region12: #{tpu_custom_call.1} parent=1 // pred_region
      _
    $region13: #{tpu_custom_call.1} parent=1 // pred_fallthru
      _
    // Predicated region
    $region14: #{tpu_custom_call.1} parent=1 // pred_check
      _
    $region15: #{tpu_custom_call.1} parent=1 // pred_check_branch
      %22 = sbr.rel (0) target = $region17
    $region16: #{tpu_custom_call.1} parent=1 // pred_region
      _
    $region17: #{tpu_custom_call.1} parent=1 // pred_fallthru
      _
    // Predicated region
    $region18: #{tpu_custom_call.1} parent=1 // pred_check
      _
    $region19: #{tpu_custom_call.1} parent=1 // pred_check_branch
      %24 = sbr.rel (0) target = $region21
    $region20: #{tpu_custom_call.1} parent=1 // pred_region
      _
    $region21: #{tpu_custom_call.1} parent=1 // pred_fallthru
      _
    // Predicated region
    $region22: #{tpu_custom_call.1} parent=1 // pred_check
      _
    $region23: #{tpu_custom_call.1} parent=1 // pred_check_branch
      %26 = sbr.rel (0) target = $region25
    $region24: #{tpu_custom_call.1} parent=1 // pred_region
      _
    $region25: #{tpu_custom_call.1} parent=1 // pred_fallthru
      _
    // Predicated region
    $region26: #{tpu_custom_call.1} parent=1 // pred_check
      _
    $region27: #{tpu_custom_call.1} parent=1 // pred_check_branch
      %28 = sbr.rel (0) target = $region29
    $region28: #{tpu_custom_call.1} parent=1 // pred_region
      _
    $region29: #{tpu_custom_call.1} parent=1 // pred_fallthru
      _
    %v30 = vld [vmem:[%s0] sm:$0xf]
    %v31 = vld [vmem:[%s0 + $0x4] sm:$0xf]
    %v32 = vld [vmem:[%s0 + $0x8] sm:$0xf]
    %v33 = vld [vmem:[%s0 + $0xc] sm:$0xf]
    %v34 = vld [vmem:[%s0 + $0x10] sm:$0xf]
    %v35 = vld [vmem:[%s0 + $0x14] sm:$0xf]
    %v36 = vld [vmem:[%s0 + $0x18] sm:$0xf]
    %v37 = vld [vmem:[%s0 + $0x1c] sm:$0xf]
    %v38 = vld [vmem:[%s0 + $0x20] sm:$0xf]
    %v39 = vld [vmem:[%s0 + $0x24] sm:$0xf]
    %v40 = vld [vmem:[%s0 + $0x28] sm:$0xf]
    %v41 = vld [vmem:[%s0 + $0x2c] sm:$0xf]
    %v42 = vld [vmem:[%s0 + $0x30] sm:$0xf]
    %v43 = vld [vmem:[%s0 + $0x34] sm:$0xf]
    %v44 = vld [vmem:[%s0 + $0x38] sm:$0xf]
    %v45 = vld [vmem:[%s0 + $0x3c] sm:$0xf]
    %v46 = vld [vmem:[%s1] sm:$0xf]
    %v47 = vld [vmem:[%s1 + $0x4] sm:$0xf]
    %v48 = vld [vmem:[%s1 + $0x8] sm:$0xf]
    %v49 = vld [vmem:[%s1 + $0xc] sm:$0xf]
    %v50 = vld [vmem:[%s1 + $0x10] sm:$0xf]
    %v51 = vld [vmem:[%s1 + $0x14] sm:$0xf]
    %v52 = vld [vmem:[%s1 + $0x18] sm:$0xf]
    %v53 = vld [vmem:[%s1 + $0x1c] sm:$0xf]
    %v54 = vld [vmem:[%s1 + $0x20] sm:$0xf]
    %v55 = vld [vmem:[%s1 + $0x24] sm:$0xf]
    %v56 = vld [vmem:[%s1 + $0x28] sm:$0xf]
    %v57 = vld [vmem:[%s1 + $0x2c] sm:$0xf]
    %v58 = vld [vmem:[%s1 + $0x30] sm:$0xf]
    %v59 = vld [vmem:[%s1 + $0x34] sm:$0xf]
    %v60 = vld [vmem:[%s1 + $0x38] sm:$0xf]
    %v61 = vld [vmem:[%s1 + $0x3c] sm:$0xf]
    %v62 = vld [vmem:[%s2] sm:$0x1]
    %v64 = vlaneseq
    %v65 = vshrl.u32 %v64, 7
    %v66 = vsub.s32 0, %v65
    %v67 = vrot.slane %v62, %v66
    %v85 = vunpack.c.l.b16 %v30
    %v86 = vunpack.c.l.b16 %v31
    %v87 = vunpack.c.l.b16 %v32
    %v88 = vunpack.c.l.b16 %v33
    %v89 = vunpack.c.l.b16 %v34
    %v90 = vunpack.c.l.b16 %v35
    %v91 = vunpack.c.l.b16 %v36
    %v92 = vunpack.c.l.b16 %v37
    %v93 = vunpack.c.l.b16 %v38
    %v94 = vunpack.c.l.b16 %v39
    %v95 = vunpack.c.l.b16 %v40
    %v96 = vunpack.c.l.b16 %v41
    %v97 = vunpack.c.l.b16 %v42
    %v98 = vunpack.c.l.b16 %v43
    %v99 = vunpack.c.l.b16 %v44
    %v100 = vunpack.c.l.b16 %v45
    %v101 = vpack.c.b16 %v86, %v85
    %v102 = vpack.c.b16 %v88, %v87
    %v103 = vpack.c.b16 %v90, %v89
    %v104 = vpack.c.b16 %v92, %v91
    %v105 = vpack.c.b16 %v94, %v93
    %v106 = vpack.c.b16 %v96, %v95
    %v107 = vpack.c.b16 %v98, %v97
    %v108 = vpack.c.b16 %v100, %v99
    %v133 = vunpack.c.l.b16 %v46
    %v134 = vunpack.c.l.b16 %v47
    %v135 = vunpack.c.l.b16 %v48
    %v136 = vunpack.c.l.b16 %v49
    %v137 = vunpack.c.l.b16 %v50
    %v138 = vunpack.c.l.b16 %v51
    %v139 = vunpack.c.l.b16 %v52
    %v140 = vunpack.c.l.b16 %v53
    %v141 = vunpack.c.l.b16 %v54
    %v142 = vunpack.c.l.b16 %v55
    %v143 = vunpack.c.l.b16 %v56
    %v144 = vunpack.c.l.b16 %v57
    %v145 = vunpack.c.l.b16 %v58
    %v146 = vunpack.c.l.b16 %v59
    %v147 = vunpack.c.l.b16 %v60
    %v148 = vunpack.c.l.b16 %v61
    %v149 = vpack.c.b16 %v134, %v133
    %v150 = vpack.c.b16 %v136, %v135
    %v151 = vpack.c.b16 %v138, %v137
    %v152 = vpack.c.b16 %v140, %v139
    %v153 = vpack.c.b16 %v142, %v141
    %v154 = vpack.c.b16 %v144, %v143
    %v155 = vpack.c.b16 %v146, %v145
    %v156 = vpack.c.b16 %v148, %v147
    %165 = vmatprep.subr.bf16.mxu0 0
    %166 = vmatpush1.bf16.msra.mxu0 %v156
    %167 = vmatprep.subr.bf16.mxu0 0
    %168 = vmatpush1.bf16.msra.mxu0 %v155
    %169 = vmatprep.subr.bf16.mxu0 0
    %170 = vmatpush1.bf16.msra.mxu0 %v154
    %171 = vmatprep.subr.bf16.mxu0 0
    %172 = vmatpush1.bf16.msra.mxu0 %v153
    %173 = vmatprep.subr.bf16.mxu0 0
    %174 = vmatpush1.bf16.msra.mxu0 %v152
    %175 = vmatprep.subr.bf16.mxu0 0
    %176 = vmatpush1.bf16.msra.mxu0 %v151
    %177 = vmatprep.subr.bf16.mxu0 0
    %178 = vmatpush1.bf16.msra.mxu0 %v150
    %179 = vmatprep.subr.bf16.mxu0 0
    %180 = vmatpush1.bf16.msra.mxu0 %v149
    %181 = vmatprep.subr.bf16.mxu0 0
    %182 = vmatpush2.bf16.msra.mxu0 0
    %183 = vmatprep.subr.bf16.mxu0 0
    %184 = vmatpush2.bf16.msra.mxu0 0
    %185 = vmatprep.subr.bf16.mxu0 0
    %186 = vmatpush2.bf16.msra.mxu0 0
    %187 = vmatprep.subr.bf16.mxu0 0
    %188 = vmatpush2.bf16.msra.mxu0 0
    %189 = vmatprep.subr.bf16.mxu0 0
    %190 = vmatpush2.bf16.msra.mxu0 0
    %191 = vmatprep.subr.bf16.mxu0 0
    %192 = vmatpush2.bf16.msra.mxu0 0
    %193 = vmatprep.subr.bf16.mxu0 0
    %194 = vmatpush2.bf16.msra.mxu0 0
    %195 = vmatprep.subr.bf16.mxu0 0
    %196 = vmatpush2.bf16.msra.mxu0 0
    %197 = vmatprep.mubr.bf16.mxu0 0
    %198 = vmatmul.mubr.bf16.gmra.mxu0 %v101
    %v199 = vpop.f32.mrf.mxu0
    %v200 = vadd.f32 %v67, %v199
    %v201 = vpop.f32.mrf.mxu0
    %v202 = vpop.f32.mrf.mxu0
    %v203 = vadd.f32 %v67, %v202
    %v204 = vpop.f32.mrf.mxu0
    %205 = vmatprep.mubr.bf16.mxu0 0
    %206 = vmatmul.mubr.bf16.gmra.mxu0 %v102
    %v207 = vpop.f32.mrf.mxu0
    %v208 = vadd.f32 %v67, %v207
    %v209 = vpop.f32.mrf.mxu0
    %v210 = vpop.f32.mrf.mxu0
    %v211 = vadd.f32 %v67, %v210
    %v212 = vpop.f32.mrf.mxu0
    %213 = vmatprep.mubr.bf16.mxu0 0
    %214 = vmatmul.mubr.bf16.gmra.mxu0 %v103
    %v215 = vpop.f32.mrf.mxu0
    %v216 = vadd.f32 %v67, %v215
    %v217 = vpop.f32.mrf.mxu0
    %v218 = vpop.f32.mrf.mxu0
    %v219 = vadd.f32 %v67, %v218
    %v220 = vpop.f32.mrf.mxu0
    %221 = vmatprep.mubr.bf16.mxu0 0
    %222 = vmatmul.mubr.bf16.gmra.mxu0 %v104
    %v223 = vpop.f32.mrf.mxu0
    %v224 = vadd.f32 %v67, %v223
    %v225 = vpop.f32.mrf.mxu0
    %v226 = vpop.f32.mrf.mxu0
    %v227 = vadd.f32 %v67, %v226
    %v228 = vpop.f32.mrf.mxu0
    %229 = vmatprep.mubr.bf16.mxu0 0
    %230 = vmatmul.mubr.bf16.gmra.mxu0 %v105
    %v231 = vpop.f32.mrf.mxu0
    %v232 = vadd.f32 %v67, %v231
    %v233 = vpop.f32.mrf.mxu0
    %v234 = vpop.f32.mrf.mxu0
    %v235 = vadd.f32 %v67, %v234
    %v236 = vpop.f32.mrf.mxu0
    %237 = vmatprep.mubr.bf16.mxu0 0
    %238 = vmatmul.mubr.bf16.gmra.mxu0 %v106
    %v239 = vpop.f32.mrf.mxu0
    %v240 = vadd.f32 %v67, %v239
    %v241 = vpop.f32.mrf.mxu0
    %v242 = vpop.f32.mrf.mxu0
    %v243 = vadd.f32 %v67, %v242
    %v244 = vpop.f32.mrf.mxu0
    %245 = vmatprep.mubr.bf16.mxu0 0
    %246 = vmatmul.mubr.bf16.gmra.mxu0 %v107
    %v247 = vpop.f32.mrf.mxu0
    %v248 = vadd.f32 %v67, %v247
    %v249 = vpop.f32.mrf.mxu0
    %v250 = vpop.f32.mrf.mxu0
    %v251 = vadd.f32 %v67, %v250
    %v252 = vpop.f32.mrf.mxu0
    %253 = vmatprep.mubr.bf16.mxu0 0
    %254 = vmatmul.mubr.bf16.gmra.mxu0 %v108
    %v255 = vpop.f32.mrf.mxu0
    %v256 = vadd.f32 %v67, %v255
    %v257 = vpop.f32.mrf.mxu0
    %v258 = vpop.f32.mrf.mxu0
    %v259 = vadd.f32 %v67, %v258
    %v260 = vpop.f32.mrf.mxu0
    %261 = vdwg.mxu0
    %v262 = vmax.f32 %v200, 0.0
    %v263 = vmax.f32 %v203, 0.0
    %v264 = vmax.f32 %v208, 0.0
    %v265 = vmax.f32 %v211, 0.0
    %v266 = vmax.f32 %v216, 0.0
    %v267 = vmax.f32 %v219, 0.0
    %v268 = vmax.f32 %v224, 0.0
    %v269 = vmax.f32 %v227, 0.0
    %v270 = vmax.f32 %v232, 0.0
    %v271 = vmax.f32 %v235, 0.0
    %v272 = vmax.f32 %v240, 0.0
    %v273 = vmax.f32 %v243, 0.0
    %v274 = vmax.f32 %v248, 0.0
    %v275 = vmax.f32 %v251, 0.0
    %v276 = vmax.f32 %v256, 0.0
    %v277 = vmax.f32 %v259, 0.0
    %v278 = vpack.c.bf16 %v263, %v262
    %v279 = vpack.c.bf16 %v265, %v264
    %v280 = vpack.c.bf16 %v267, %v266
    %v281 = vpack.c.bf16 %v269, %v268
    %v282 = vpack.c.bf16 %v271, %v270
    %v283 = vpack.c.bf16 %v273, %v272
    %v284 = vpack.c.bf16 %v275, %v274
    %v285 = vpack.c.bf16 %v277, %v276
    %v286 = vld [vmem:[%s3] sm:$0xf]
    %v287 = vld [vmem:[%s3 + $0x4] sm:$0xf]
    %v288 = vld [vmem:[%s3 + $0x8] sm:$0xf]
    %v289 = vld [vmem:[%s3 + $0xc] sm:$0xf]
    %v290 = vld [vmem:[%s3 + $0x10] sm:$0xf]
    %v291 = vld [vmem:[%s3 + $0x14] sm:$0xf]
    %v292 = vld [vmem:[%s3 + $0x18] sm:$0xf]
    %v293 = vld [vmem:[%s3 + $0x1c] sm:$0xf]
    %v294 = vld [vmem:[%s4] sm:$0x1]
    %v296 = vlaneseq
    %v297 = vshrl.u32 %v296, 7
    %v298 = vsub.s32 0, %v297
    %v299 = vrot.slane %v294, %v298
    %v309 = vunpack.c.l.b16 %v286
    %v310 = vunpack.c.l.b16 %v287
    %v311 = vunpack.c.l.b16 %v288
    %v312 = vunpack.c.l.b16 %v289
    %v313 = vunpack.c.l.b16 %v290
    %v314 = vunpack.c.l.b16 %v291
    %v315 = vunpack.c.l.b16 %v292
    %v316 = vunpack.c.l.b16 %v293
    %v317 = vpack.c.b16 %v310, %v309
    %v318 = vpack.c.b16 %v312, %v311
    %v319 = vpack.c.b16 %v314, %v313
    %v320 = vpack.c.b16 %v316, %v315
    %vm325 = vcmask 523264
    %v327 = vsel %vm325, %v278, 0
    %v330 = vsel %vm325, %v279, 0
    %v333 = vsel %vm325, %v280, 0
    %v336 = vsel %vm325, %v281, 0
    %v339 = vsel %vm325, %v282, 0
    %v342 = vsel %vm325, %v283, 0
    %v345 = vsel %vm325, %v284, 0
    %v348 = vsel %vm325, %v285, 0
    %350 = vmatprep.subr.bf16.mxu0 0
    %351 = vmatpush1.bf16.msra.mxu0 0
    %352 = vmatprep.subr.bf16.mxu0 0
    %353 = vmatpush1.bf16.msra.mxu0 0
    %354 = vmatprep.subr.bf16.mxu0 0
    %355 = vmatpush1.bf16.msra.mxu0 0
    %356 = vmatprep.subr.bf16.mxu0 0
    %357 = vmatpush1.bf16.msra.mxu0 0
    %358 = vmatprep.subr.bf16.mxu0 0
    %359 = vmatpush1.bf16.msra.mxu0 %v320
    %360 = vmatprep.subr.bf16.mxu0 0
    %361 = vmatpush1.bf16.msra.mxu0 %v319
    %362 = vmatprep.subr.bf16.mxu0 0
    %363 = vmatpush1.bf16.msra.mxu0 %v318
    %364 = vmatprep.subr.bf16.mxu0 0
    %365 = vmatpush1.bf16.msra.mxu0 %v317
    %366 = vmatprep.subr.bf16.mxu0 0
    %367 = vmatpush2.bf16.msra.mxu0 0
    %368 = vmatprep.subr.bf16.mxu0 0
    %369 = vmatpush2.bf16.msra.mxu0 0
    %370 = vmatprep.subr.bf16.mxu0 0
    %371 = vmatpush2.bf16.msra.mxu0 0
    %372 = vmatprep.subr.bf16.mxu0 0
    %373 = vmatpush2.bf16.msra.mxu0 0
    %374 = vmatprep.subr.bf16.mxu0 0
    %375 = vmatpush2.bf16.msra.mxu0 0
    %376 = vmatprep.subr.bf16.mxu0 0
    %377 = vmatpush2.bf16.msra.mxu0 0
    %378 = vmatprep.subr.bf16.mxu0 0
    %379 = vmatpush2.bf16.msra.mxu0 0
    %380 = vmatprep.subr.bf16.mxu0 0
    %381 = vmatpush2.bf16.msra.mxu0 0
    %382 = vmatprep.mubr.bf16.mxu0 0
    %383 = vmatmul.mubr.bf16.gmra.mxu0 %v327
    %v384 = vpop.f32.mrf.mxu0
    %v385 = vadd.f32 %v299, %v384
    %v386 = vpop.f32.mrf.mxu0
    %v387 = vpop.f32.mrf.mxu0
    %v388 = vadd.f32 %v299, %v387
    %v389 = vpop.f32.mrf.mxu0
    %390 = vmatprep.mubr.bf16.mxu0 0
    %391 = vmatmul.mubr.bf16.gmra.mxu0 %v330
    %v392 = vpop.f32.mrf.mxu0
    %v393 = vadd.f32 %v299, %v392
    %v394 = vpop.f32.mrf.mxu0
    %v395 = vpop.f32.mrf.mxu0
    %v396 = vadd.f32 %v299, %v395
    %v397 = vpop.f32.mrf.mxu0
    %398 = vmatprep.mubr.bf16.mxu0 0
    %399 = vmatmul.mubr.bf16.gmra.mxu0 %v333
    %v400 = vpop.f32.mrf.mxu0
    %v401 = vadd.f32 %v299, %v400
    %v402 = vpop.f32.mrf.mxu0
    %v403 = vpop.f32.mrf.mxu0
    %v404 = vadd.f32 %v299, %v403
    %v405 = vpop.f32.mrf.mxu0
    %406 = vmatprep.mubr.bf16.mxu0 0
    %407 = vmatmul.mubr.bf16.gmra.mxu0 %v336
    %v408 = vpop.f32.mrf.mxu0
    %v409 = vadd.f32 %v299, %v408
    %v410 = vpop.f32.mrf.mxu0
    %v411 = vpop.f32.mrf.mxu0
    %v412 = vadd.f32 %v299, %v411
    %v413 = vpop.f32.mrf.mxu0
    %414 = vmatprep.mubr.bf16.mxu0 0
    %415 = vmatmul.mubr.bf16.gmra.mxu0 %v339
    %v416 = vpop.f32.mrf.mxu0
    %v417 = vadd.f32 %v299, %v416
    %v418 = vpop.f32.mrf.mxu0
    %v419 = vpop.f32.mrf.mxu0
    %v420 = vadd.f32 %v299, %v419
    %v421 = vpop.f32.mrf.mxu0
    %422 = vmatprep.mubr.bf16.mxu0 0
    %423 = vmatmul.mubr.bf16.gmra.mxu0 %v342
    %v424 = vpop.f32.mrf.mxu0
    %v425 = vadd.f32 %v299, %v424
    %v426 = vpop.f32.mrf.mxu0
    %v427 = vpop.f32.mrf.mxu0
    %v428 = vadd.f32 %v299, %v427
    %v429 = vpop.f32.mrf.mxu0
    %430 = vmatprep.mubr.bf16.mxu0 0
    %431 = vmatmul.mubr.bf16.gmra.mxu0 %v345
    %v432 = vpop.f32.mrf.mxu0
    %v433 = vadd.f32 %v299, %v432
    %v434 = vpop.f32.mrf.mxu0
    %v435 = vpop.f32.mrf.mxu0
    %v436 = vadd.f32 %v299, %v435
    %v437 = vpop.f32.mrf.mxu0
    %438 = vmatprep.mubr.bf16.mxu0 0
    %439 = vmatmul.mubr.bf16.gmra.mxu0 %v348
    %v440 = vpop.f32.mrf.mxu0
    %v441 = vadd.f32 %v299, %v440
    %v442 = vpop.f32.mrf.mxu0
    %v443 = vpop.f32.mrf.mxu0
    %v444 = vadd.f32 %v299, %v443
    %v445 = vpop.f32.mrf.mxu0
    %446 = vdwg.mxu0
    %v447 = vmax.f32 %v385, 0.0
    %v448 = vmax.f32 %v388, 0.0
    %v449 = vmax.f32 %v393, 0.0
    %v450 = vmax.f32 %v396, 0.0
    %v451 = vmax.f32 %v401, 0.0
    %v452 = vmax.f32 %v404, 0.0
    %v453 = vmax.f32 %v409, 0.0
    %v454 = vmax.f32 %v412, 0.0
    %v455 = vmax.f32 %v417, 0.0
    %v456 = vmax.f32 %v420, 0.0
    %v457 = vmax.f32 %v425, 0.0
    %v458 = vmax.f32 %v428, 0.0
    %v459 = vmax.f32 %v433, 0.0
    %v460 = vmax.f32 %v436, 0.0
    %v461 = vmax.f32 %v441, 0.0
    %v462 = vmax.f32 %v444, 0.0
    %v463 = vld [vmem:[%s5] sm:$0x1]
    %v464 = vld [vmem:[#allocation2] sm:$0x1]
    %466 = vset.pattern.permute.xlu0 0
    %467 = vperm.xlu0 %466, %v464
    %v468 = vpop.permute.xlu0 %467
    %v470 = vlaneseq
    %v471 = vshrl.u32 %v470, 7
    %v472 = vsub.s32 0, %v471
    %v473 = vrot.slane %v468, %v472
    %v475 = vsel %vm325, %v463, 0
    %v478 = vsel %vm325, %v447, 0
    %v481 = vsel %vm325, %v448, 0
    %v484 = vsel %vm325, %v449, 0
    %v487 = vsel %vm325, %v450, 0
    %v490 = vsel %vm325, %v451, 0
    %v493 = vsel %vm325, %v452, 0
    %v496 = vsel %vm325, %v453, 0
    %v499 = vsel %vm325, %v454, 0
    %v502 = vsel %vm325, %v455, 0
    %v505 = vsel %vm325, %v456, 0
    %v508 = vsel %vm325, %v457, 0
    %v511 = vsel %vm325, %v458, 0
    %v514 = vsel %vm325, %v459, 0
    %v517 = vsel %vm325, %v460, 0
    %v520 = vsel %vm325, %v461, 0
    %v523 = vsel %vm325, %v462, 0
    %525 = vmatprep.subr.mxu0 0.0
    %526 = vmatpush1.xpose.msra.mxu0 %v523
    %527 = vmatprep.subr.mxu0 0.0
    %528 = vmatpush1.xpose.msra.mxu0 %v520
    %529 = vmatprep.subr.mxu0 0.0
    %530 = vmatpush1.xpose.msra.mxu0 %v517
    %531 = vmatprep.subr.mxu0 0.0
    %532 = vmatpush1.xpose.msra.mxu0 %v514
    %533 = vmatprep.subr.mxu0 0.0
    %534 = vmatpush1.xpose.msra.mxu0 %v511
    %535 = vmatprep.subr.mxu0 0.0
    %536 = vmatpush1.xpose.msra.mxu0 %v508
    %537 = vmatprep.subr.mxu0 0.0
    %538 = vmatpush1.xpose.msra.mxu0 %v505
    %539 = vmatprep.subr.mxu0 0.0
    %540 = vmatpush1.xpose.msra.mxu0 %v502
    %541 = vmatprep.subr.mxu0 0.0
    %542 = vmatpush1.xpose.msra.mxu0 %v499
    %543 = vmatprep.subr.mxu0 0.0
    %544 = vmatpush1.xpose.msra.mxu0 %v496
    %545 = vmatprep.subr.mxu0 0.0
    %546 = vmatpush1.xpose.msra.mxu0 %v493
    %547 = vmatprep.subr.mxu0 0.0
    %548 = vmatpush1.xpose.msra.mxu0 %v490
    %549 = vmatprep.subr.mxu0 0.0
    %550 = vmatpush1.xpose.msra.mxu0 %v487
    %551 = vmatprep.subr.mxu0 0.0
    %552 = vmatpush1.xpose.msra.mxu0 %v484
    %553 = vmatprep.subr.mxu0 0.0
    %554 = vmatpush1.xpose.msra.mxu0 %v481
    %555 = vmatprep.subr.mxu0 0.0
    %556 = vmatpush1.xpose.msra.mxu0 %v478
    %557 = vmatprep.subr.mxu0 0.0
    %558 = vmatpush2.xpose.msra.mxu0 0.0
    %559 = vmatprep.subr.mxu0 0.0
    %560 = vmatpush2.xpose.msra.mxu0 0.0
    %561 = vmatprep.subr.mxu0 0.0
    %562 = vmatpush2.xpose.msra.mxu0 0.0
    %563 = vmatprep.subr.mxu0 0.0
    %564 = vmatpush2.xpose.msra.mxu0 0.0
    %565 = vmatprep.subr.mxu0 0.0
    %566 = vmatpush2.xpose.msra.mxu0 0.0
    %567 = vmatprep.subr.mxu0 0.0
    %568 = vmatpush2.xpose.msra.mxu0 0.0
    %569 = vmatprep.subr.mxu0 0.0
    %570 = vmatpush2.xpose.msra.mxu0 0.0
    %571 = vmatprep.subr.mxu0 0.0
    %572 = vmatpush2.xpose.msra.mxu0 0.0
    %573 = vmatprep.subr.mxu0 0.0
    %574 = vmatpush2.xpose.msra.mxu0 0.0
    %575 = vmatprep.subr.mxu0 0.0
    %576 = vmatpush2.xpose.msra.mxu0 0.0
    %577 = vmatprep.subr.mxu0 0.0
    %578 = vmatpush2.xpose.msra.mxu0 0.0
    %579 = vmatprep.subr.mxu0 0.0
    %580 = vmatpush2.xpose.msra.mxu0 0.0
    %581 = vmatprep.subr.mxu0 0.0
    %582 = vmatpush2.xpose.msra.mxu0 0.0
    %583 = vmatprep.subr.mxu0 0.0
    %584 = vmatpush2.xpose.msra.mxu0 0.0
    %585 = vmatprep.subr.mxu0 0.0
    %586 = vmatpush2.xpose.msra.mxu0 0.0
    %587 = vmatprep.subr.mxu0 0.0
    %588 = vmatpush2.xpose.msra.mxu0 0.0
    %589 = vmatprep.mubr.f32.mxu0 0.0
    %590 = vmatmul.mubr.f32.gmra.mxu0 %v475
    %v591 = vpop.f32.mrf.mxu0
    %v592 = vadd.f32 %v473, %v591
    %v593 = vpop.f32.mrf.mxu0
    %594 = vdwg.mxu0
    %595 = vst [vmem:[#allocation3] sm:$0x1] %v592
    // Predicated region
    $region30: #{tpu_custom_call.1} parent=1 // pred_check
      _
    $region31: #{tpu_custom_call.1} parent=1 // pred_check_branch
      %597 = sbr.rel (0) target = $region33
    $region32: #{tpu_custom_call.1} parent=1 // pred_region
      %s599 = ssub.s32 16, 16
      %600 = vsyncadd [#allocation4], %s599
      %s602 = sshll.u32 [#allocation3], 4
      %s603 = int_to_ptr.vmem [resolvable:$true] %s602
      %605 = dma.vmem_to_hbm [thread:$0]  %s603, 16, %s7, [#allocation4]
    $region33: #{tpu_custom_call.1} parent=1 // pred_fallthru
      _
    // Predicated region
    $region34: #{tpu_custom_call.1} parent=1 // pred_check
      _
    $region35: #{tpu_custom_call.1} parent=1 // pred_check_branch
      %607 = sbr.rel (0) target = $region37
    $region36: #{tpu_custom_call.1} parent=1 // pred_region
      %608 = dma.done [#allocation4], 16
    $region37: #{tpu_custom_call.1} parent=1 // pred_fallthru
      _
    %609 = vsyncpa [#allocation4], 1

</llo_original>
